<compile_context>
chip_gen: v7x
topology: tpu7x:2x2x1
jax: 0.10.0
libtpu: 0.0.40
codegen_flags: <defaults>
</compile_context>

<pallas_src>
import functools

import jax
import jax.numpy as jnp
from jax.experimental import pallas as pl
from jax.experimental.pallas import tpu as pltpu


def _make_kernel(C, H, W, HW, Nb, Gpc, N, eps):
    """Kernel over one block of Nb images: x (Nb, C*HW) f32, t (Nb, HW) int."""

    def kernel(x_ref, t_ref, acc_ref):
        i = pl.program_id(0)          # per-core partial axis ("parallel")
        g = pl.program_id(1)          # batch-group axis ("arbitrary", accumulated)

        @pl.when(g == 0)
        def _init():
            acc_ref[...] = jnp.zeros_like(acc_ref)

        t = t_ref[...].astype(jnp.int32)                  # (Nb, HW)

        # ---- per-pixel class loop: argmax, x[target], sum(exp) -------------
        # Class c of every image is the static lane slice [c*HW, (c+1)*HW) of
        # the (Nb, C*HW) block: a free, tile-aligned sub-view (HW % 128 == 0).
        x0 = x_ref[:, 0:HW]                               # (Nb, HW)
        best_val = x0
        best_idx = jnp.zeros((Nb, HW), jnp.int32)
        x_at_t = jnp.where(t == 0, x0, 0.0)
        exp_sum = jnp.exp(x0)
        for c in range(1, C):                             # C small & static
            xc = x_ref[:, c * HW:(c + 1) * HW]
            exp_sum = exp_sum + jnp.exp(xc)
            better = xc > best_val
            best_val = jnp.where(better, xc, best_val)
            best_idx = jnp.where(better, jnp.int32(c), best_idx)
            x_at_t = jnp.where(t == c, xc, x_at_t)
        # One extra EUP exp instead of (C-1) full-plane VPU selects.
        exp_at_t = jnp.exp(x_at_t)
        nll = -x_at_t                                     # NLLLoss(reduction='none')
        # TODO(synk): no max-subtraction before exp (matches the PyTorch module);
        # logits above ~88 overflow exp_sum / exp_at_t exactly like the reference.

        # ---- TI interaction [inclusion, A=2, B=1] --------------------------
        P = best_idx
        in_A = P == 2
        in_C = jnp.logical_not(jnp.logical_or(P == 1, in_A))

        # Edge masks from a single (1, HW) lane iota (no per-image loop).  Each
        # image owns one sublane row, so lane rolls never cross images.
        col = jax.lax.broadcasted_iota(jnp.int32, (1, HW), 1)
        if W & (W - 1) == 0:
            w_pos = col & (W - 1)                         # power-of-two bit trick
        else:
            w_pos = col % W                               # tiny (1, HW) row only
        not_left = w_pos != 0
        not_right = w_pos != (W - 1)
        not_top = col >= W
        not_bot = col < (HW - W)

        # Fused separable 3x3 "any" (connectivity 8, zero padding): both masks
        # travel as bits of one int32 plane -> 4 rolls + 4 selects total.
        bits = in_A.astype(jnp.int32) | (in_C.astype(jnp.int32) * 2)
        h = bits
        h = h | jnp.where(not_right, pltpu.roll(bits, HW - 1, axis=1), 0)   # (h, w+1)
        h = h | jnp.where(not_left, pltpu.roll(bits, 1, axis=1), 0)         # (h, w-1)
        box = h
        box = box | jnp.where(not_bot, pltpu.roll(h, HW - W, axis=1), 0)    # (h+1, w)
        box = box | jnp.where(not_top, pltpu.roll(h, W, axis=1), 0)         # (h-1, w)
        nbr_A = (box & 1) > 0
        nbr_C = (box & 2) > 0
        violating = jnp.logical_or(jnp.logical_and(nbr_C, in_A),
                                   jnp.logical_and(nbr_A, in_C))
        ti_plane = jnp.where(violating, nll, 0.0)         # critical folded into select

        # ---- per-image reductions: one lane reduce per plane ----------------
        ti_col = jnp.sum(ti_plane, axis=1, keepdims=True)     # (Nb, 1)
        nll_col = jnp.sum(nll, axis=1, keepdims=True)
        inter_col = jnp.sum(exp_at_t, axis=1, keepdims=True)
        card_col = jnp.sum(exp_sum, axis=1, keepdims=True) + float(HW)
        # TODO(synk): torchgeometry's one_hot adds eps=1e-6 to the one-hot tensor;
        # we use an exact one-hot (difference ~1e-6 on the dice term).
        dice_col = 1.0 - 2.0 * inter_col / (card_col + eps)

        # Mask batch padding by global image index (robust even if the padded
        # slots ever carry non-zero data).
        img = jax.lax.broadcasted_iota(jnp.int32, (Nb, 1), 0) + (i * Gpc + g) * Nb
        valid = (img < N).astype(jnp.float32)
        ti_s = jnp.sum(ti_col * valid, axis=0, keepdims=True)     # (1, 1)
        nll_s = jnp.sum(nll_col * valid, axis=0, keepdims=True)
        dice_s = jnp.sum(dice_col * valid, axis=0, keepdims=True)
        # TODO(synk): these reductions could be offloaded to the idle MXU
        # (dot-with-ones); XLU has slack so plain reduces are kept.

        # Single lane-aligned accumulator row per core: slot0=TI, 1=dice, 2=NLL.
        lane = jax.lax.broadcasted_iota(jnp.int32, (1, 1, 128), 2)
        upd = (jnp.where(lane == 0, ti_s.reshape(1, 1, 1), 0.0)
               + jnp.where(lane == 1, dice_s.reshape(1, 1, 1), 0.0)
               + jnp.where(lane == 2, nll_s.reshape(1, 1, 1), 0.0))
        acc_ref[...] = acc_ref[...] + upd

    return kernel


@functools.partial(jax.jit,
                   static_argnames=("ti_weight", "dice_weight", "images_per_block"))
def finalloss(x, target, ti_weight=1e-4, dice_weight=1.0, images_per_block=None):
    """x: (N, C, H, W) float logits; target: (N, 1, H, W) int labels in [0, C)."""
    N, C, H, W = x.shape
    HW = H * W
    eps = 1e-6
    x = x.astype(jnp.float32)
    label_dtype = jnp.int8 if C <= 127 else jnp.int32   # 4x less label HBM traffic
    # Free relayouts only: merging (C,H,W) / (H,W) into one lane axis is a
    # reshape of contiguous memory -> no wrapper transpose / extra pass over x.
    x2 = x.reshape(N, C * HW)
    t2 = target.reshape(N, HW).astype(label_dtype)

    # --- block sizing: images along sublanes, flattened C*H*W along lanes ----
    bytes_per_img = C * HW * 4 + HW * jnp.dtype(label_dtype).itemsize
    target_block = 2 << 20                       # ~2 MiB blocks (review: 0.5-4 MiB)
    if images_per_block is not None:
        Nb = min(int(images_per_block), N)
    elif N * bytes_per_img <= target_block or N <= 8:
        Nb = N                                   # whole batch in one block
    else:
        Nb = min(N, max(1, target_block // bytes_per_img))
    if Nb < N:
        Nb = max(8, (Nb // 8) * 8)               # blocked sublane dim must be % 8
    G = -(-N // Nb)                              # number of image groups
    NC = 2 if (G >= 2 and G % 2 == 0) else 1     # per-core partials only when free
    Gpc = G // NC
    Np = NC * Gpc * Nb

    if Np > N:
        # Zero-pad only the ragged tail group (masked in-kernel); the common
        # divisible / whole-batch case copies nothing.
        x2 = jnp.pad(x2, ((0, Np - N), (0, 0)))
        t2 = jnp.pad(t2, ((0, Np - N), (0, 0)))

    block_bytes = Nb * bytes_per_img
    # 2 inputs x 2 pipeline buffers + accumulator + margin; v7x-safe <= 48 MiB.
    vmem_limit = int(min(48 << 20, max(32 << 20, 4 * block_bytes + (2 << 20))))
    # TODO(synk): for very large H*W (single image >> target_block) add an
    # H-strip grid axis (strip % 8 rows, 1-row halo) so blocks fit v7x's VMEM.
    # TODO(synk): verify megacore sharding of the NC axis (pltpu.CORE_PARALLEL)
    # and consider pl.Buffered(3) / bf16 logits on v5e if DMA is still exposed.

    kernel = _make_kernel(C, H, W, HW, Nb, Gpc, N, eps)
    acc = pl.pallas_call(
        kernel,
        grid=(NC, Gpc),
        in_specs=[
            pl.BlockSpec((Nb, C * HW), lambda i, g: (i * Gpc + g, 0)),
            pl.BlockSpec((Nb, HW), lambda i, g: (i * Gpc + g, 0)),
        ],
        out_specs=pl.BlockSpec((1, 1, 128), lambda i, g: (i, 0, 0)),
        out_shape=jax.ShapeDtypeStruct((NC, 1, 128), jnp.float32),
        compiler_params=pltpu.CompilerParams(
            dimension_semantics=("parallel", "arbitrary"),
            vmem_limit_bytes=vmem_limit),
    )(x2, t2)

    totals = jnp.sum(acc, axis=(0, 1))           # sum the per-core partial rows
    ti_loss = totals[0] / N                      # mean over batch of TI sums
    dice_loss = totals[1] / N                    # mean over batch of dice terms
    nll_mean = totals[2] / (N * H * W)           # NLLLoss(reduction='mean')
    return ti_weight * ti_loss + dice_weight * dice_loss + nll_mean


def _reference(x, target, ti_weight=1e-4, dice_weight=1.0, eps=1e-6):
    """Pure-JAX reference replicating the PyTorch forward semantics."""
    N, C, H, W = x.shape
    x = x.astype(jnp.float32)
    t = target.reshape(N, H, W).astype(jnp.int32)
    nll = -jnp.take_along_axis(x, t[:, None], axis=1)[:, 0]       # (N,H,W)
    P = jnp.argmax(x, axis=1)
    mask_A = (P == 2).astype(jnp.float32)
    mask_C = (~((P == 1) | (P == 2))).astype(jnp.float32)

    def box(m):
        mp = jnp.pad(m, ((0, 0), (1, 1), (1, 1)))
        s = sum(mp[:, i:i + H, j:j + W] for i in range(3) for j in range(3))
        return (s >= 1.0).astype(jnp.float32)

    nbr_A, nbr_C = box(mask_A), box(mask_C)
    critical = ((nbr_C * mask_A + nbr_A * mask_C) >= 1.0).astype(jnp.float32)
    ti = jnp.mean(jnp.sum(nll * critical, axis=(1, 2)))

    e = jnp.exp(x)
    one_hot = jax.nn.one_hot(t, C, axis=1, dtype=jnp.float32)
    inter = jnp.sum(e * one_hot, axis=(1, 2, 3))
    card = jnp.sum(e + one_hot, axis=(1, 2, 3))
    dice = jnp.mean(1.0 - 2.0 * inter / (card + eps))
    return ti_weight * ti + dice_weight * dice + jnp.mean(nll)


if __name__ == "__main__":
    # Small canonical test (whole batch in one sublane-packed block).
    key = jax.random.PRNGKey(0)
    N, C, H, W = 2, 4, 16, 16
    kx, kt = jax.random.split(key)
    x = jax.random.normal(kx, (N, C, H, W), dtype=jnp.float32)
    target = jax.random.randint(kt, (N, 1, H, W), 0, C, dtype=jnp.int32)

    loss = finalloss(x, target)
    jax.block_until_ready(loss)
    ref = _reference(x, target)
    assert jnp.allclose(loss, ref, rtol=1e-4, atol=1e-4), (loss, ref)

    # Larger batch, still one block: no padding, no relayout.
    N2 = 10
    kx2, kt2 = jax.random.split(jax.random.PRNGKey(1))
    x2 = jax.random.normal(kx2, (N2, C, H, W), dtype=jnp.float32)
    t2 = jax.random.randint(kt2, (N2, 1, H, W), 0, C, dtype=jnp.int32)
    loss2 = finalloss(x2, t2)
    jax.block_until_ready(loss2)
    ref2 = _reference(x2, t2)
    assert jnp.allclose(loss2, ref2, rtol=1e-4, atol=1e-4), (loss2, ref2)

    # Forced small blocks: exercises multi-group accumulation, ragged-batch
    # padding masks, and the two-accumulator-row (NC=2) path.
    loss3 = finalloss(x2, t2, images_per_block=8)
    jax.block_until_ready(loss3)
    assert jnp.allclose(loss3, ref2, rtol=1e-4, atol=1e-4), (loss3, ref2)

    print("KERNEL_OK")
</pallas_src>

<mosaic_0001>
module attributes {stable_mosaic.version = 11 : i64} {
  func.func @kernel(%arg0: i32, %arg1: i32, %arg2: memref<2x1024xf32, #tpu.memory_space<vmem>>, %arg3: memref<2x256xi8, #tpu.memory_space<vmem>>, %arg4: memref<1x1x128xf32, #tpu.memory_space<vmem>>) attributes {dimension_semantics = [#tpu.dimension_semantics<parallel>, #tpu.dimension_semantics<arbitrary>], iteration_bounds = array<i64: 1, 1>, scalar_prefetch = 0 : i64, scratch_operands = 0 : i64, tpu.core_type = #tpu.core_type<tc>, window_params = [{transform_indices = @transform_0, window_bounds = array<i64: 2, 1024>}, {transform_indices = @transform_1, window_bounds = array<i64: 2, 256>}, {transform_indices = @transform_2, window_bounds = array<i64: 1, 1, 128>}]} {
    %c0_i32 = arith.constant 0 : i32
    %0 = arith.cmpi eq, %arg1, %c0_i32 : i32
    %1 = arith.extui %0 : i1 to i32
    %c0_i32_0 = arith.constant 0 : i32
    %2 = arith.cmpi ne, %1, %c0_i32_0 : i32
    scf.if %2 {
      %cst_57 = arith.constant 0.000000e+00 : f32
      %166 = vector.broadcast %cst_57 : f32 to vector<1x1x128xf32>
      %c0_58 = arith.constant 0 : index
      %c0_59 = arith.constant 0 : index
      %c0_60 = arith.constant 0 : index
      %167 = vector.load %arg4[%c0_58, %c0_59, %c0_60] : memref<1x1x128xf32, #tpu.memory_space<vmem>>, vector<1x1x128xf32>
      tpu.vector_store %arg4[%c0_58, %c0_59, %c0_60], %166 {strides = array<i32>} : memref<1x1x128xf32, #tpu.memory_space<vmem>>, vector<1x1x128xf32>,
    } else {
    }
    %c0 = arith.constant 0 : index
    %c0_1 = arith.constant 0 : index
    %3 = vector.load %arg3[%c0, %c0_1] : memref<2x256xi8, #tpu.memory_space<vmem>>, vector<2x256xi8>
    %4 = arith.extsi %3 : vector<2x256xi8> to vector<2x256xi32>
    %c0_2 = arith.constant 0 : index
    %c0_3 = arith.constant 0 : index
    %5 = vector.load %arg2[%c0_2, %c0_3] : memref<2x1024xf32, #tpu.memory_space<vmem>>, vector<2x256xf32>
    %c0_i32_4 = arith.constant 0 : i32
    %6 = vector.broadcast %c0_i32_4 : i32 to vector<2x256xi32>
    %c0_i32_5 = arith.constant 0 : i32
    %7 = vector.broadcast %c0_i32_5 : i32 to vector<2x256xi32>
    %8 = arith.cmpi eq, %4, %7 : vector<2x256xi32>
    %cst = arith.constant 0.000000e+00 : f32
    %9 = vector.broadcast %cst : f32 to vector<2x256xf32>
    %10 = arith.select %8, %5, %9 : vector<2x256xi1>, vector<2x256xf32>
    %11 = math.exp %5 : vector<2x256xf32>
    %c0_6 = arith.constant 0 : index
    %c256 = arith.constant 256 : index
    %12 = vector.load %arg2[%c0_6, %c256] : memref<2x1024xf32, #tpu.memory_space<vmem>>, vector<2x256xf32>
    %13 = math.exp %12 : vector<2x256xf32>
    %14 = arith.addf %11, %13 : vector<2x256xf32>
    %15 = arith.cmpf ogt, %12, %5 : vector<2x256xf32>
    %16 = arith.select %15, %12, %5 : vector<2x256xi1>, vector<2x256xf32>
    %c1_i32 = arith.constant 1 : i32
    %17 = vector.broadcast %c1_i32 : i32 to vector<2x256xi32>
    %18 = arith.select %15, %17, %6 : vector<2x256xi1>, vector<2x256xi32>
    %c1_i32_7 = arith.constant 1 : i32
    %19 = vector.broadcast %c1_i32_7 : i32 to vector<2x256xi32>
    %20 = arith.cmpi eq, %4, %19 : vector<2x256xi32>
    %21 = arith.select %20, %12, %10 : vector<2x256xi1>, vector<2x256xf32>
    %c0_8 = arith.constant 0 : index
    %c512 = arith.constant 512 : index
    %22 = vector.load %arg2[%c0_8, %c512] : memref<2x1024xf32, #tpu.memory_space<vmem>>, vector<2x256xf32>
    %23 = math.exp %22 : vector<2x256xf32>
    %24 = arith.addf %14, %23 : vector<2x256xf32>
    %25 = arith.cmpf ogt, %22, %16 : vector<2x256xf32>
    %26 = arith.select %25, %22, %16 : vector<2x256xi1>, vector<2x256xf32>
    %c2_i32 = arith.constant 2 : i32
    %27 = vector.broadcast %c2_i32 : i32 to vector<2x256xi32>
    %28 = arith.select %25, %27, %18 : vector<2x256xi1>, vector<2x256xi32>
    %c2_i32_9 = arith.constant 2 : i32
    %29 = vector.broadcast %c2_i32_9 : i32 to vector<2x256xi32>
    %30 = arith.cmpi eq, %4, %29 : vector<2x256xi32>
    %31 = arith.select %30, %22, %21 : vector<2x256xi1>, vector<2x256xf32>
    %c0_10 = arith.constant 0 : index
    %c768 = arith.constant 768 : index
    %32 = vector.load %arg2[%c0_10, %c768] : memref<2x1024xf32, #tpu.memory_space<vmem>>, vector<2x256xf32>
    %33 = math.exp %32 : vector<2x256xf32>
    %34 = arith.addf %24, %33 : vector<2x256xf32>
    %35 = arith.cmpf ogt, %32, %26 : vector<2x256xf32>
    %c3_i32 = arith.constant 3 : i32
    %36 = vector.broadcast %c3_i32 : i32 to vector<2x256xi32>
    %37 = arith.select %35, %36, %28 : vector<2x256xi1>, vector<2x256xi32>
    %c3_i32_11 = arith.constant 3 : i32
    %38 = vector.broadcast %c3_i32_11 : i32 to vector<2x256xi32>
    %39 = arith.cmpi eq, %4, %38 : vector<2x256xi32>
    %40 = arith.select %39, %32, %31 : vector<2x256xi1>, vector<2x256xf32>
    %41 = math.exp %40 : vector<2x256xf32>
    %cst_12 = arith.constant 0.000000e+00 : f32
    %42 = vector.broadcast %cst_12 : f32 to vector<2x256xf32>
    %43 = arith.subf %42, %40 : vector<2x256xf32>
    %c2_i32_13 = arith.constant 2 : i32
    %44 = vector.broadcast %c2_i32_13 : i32 to vector<2x256xi32>
    %45 = arith.cmpi eq, %37, %44 : vector<2x256xi32>
    %c1_i32_14 = arith.constant 1 : i32
    %46 = vector.broadcast %c1_i32_14 : i32 to vector<2x256xi32>
    %47 = arith.cmpi eq, %37, %46 : vector<2x256xi32>
    %48 = arith.ori %47, %45 : vector<2x256xi1>
    %cst_15 = arith.constant dense<true> : vector<2x256xi1>
    %49 = arith.xori %48, %cst_15 : vector<2x256xi1>
    %50 = tpu.iota {dimensions = array<i32: 1>} : vector<1x256xi32>
    %c15_i32 = arith.constant 15 : i32
    %51 = vector.broadcast %c15_i32 : i32 to vector<1x256xi32>
    %52 = arith.andi %50, %51 : vector<1x256xi32>
    %c0_i32_16 = arith.constant 0 : i32
    %53 = vector.broadcast %c0_i32_16 : i32 to vector<1x256xi32>
    %54 = arith.cmpi ne, %52, %53 : vector<1x256xi32>
    %c15_i32_17 = arith.constant 15 : i32
    %55 = vector.broadcast %c15_i32_17 : i32 to vector<1x256xi32>
    %56 = arith.cmpi ne, %52, %55 : vector<1x256xi32>
    %c16_i32 = arith.constant 16 : i32
    %57 = vector.broadcast %c16_i32 : i32 to vector<1x256xi32>
    %58 = arith.cmpi sge, %50, %57 : vector<1x256xi32>
    %c240_i32 = arith.constant 240 : i32
    %59 = vector.broadcast %c240_i32 : i32 to vector<1x256xi32>
    %60 = arith.cmpi slt, %50, %59 : vector<1x256xi32>
    %61 = arith.extui %45 : vector<2x256xi1> to vector<2x256xi32>
    %62 = arith.extui %49 : vector<2x256xi1> to vector<2x256xi32>
    %c2_i32_18 = arith.constant 2 : i32
    %63 = vector.broadcast %c2_i32_18 : i32 to vector<2x256xi32>
    %64 = arith.muli %62, %63 : vector<2x256xi32>
    %65 = arith.ori %61, %64 : vector<2x256xi32>
    %c255_i32 = arith.constant 255 : i32
    %66 = tpu.dynamic_rotate %65 by %c255_i32 dim 1 : vector<2x256xi32>, i32 -> vector<2x256xi32>
    %c0_i32_19 = arith.constant 0 : i32
    %67 = vector.shape_cast %56 : vector<1x256xi1> to vector<1x256xi1>
    %68 = vector.broadcast %67 : vector<1x256xi1> to vector<2x256xi1>
    %69 = vector.broadcast %c0_i32_19 : i32 to vector<2x256xi32>
    %70 = arith.select %68, %66, %69 : vector<2x256xi1>, vector<2x256xi32>
    %71 = arith.ori %65, %70 : vector<2x256xi32>
    %c1_i32_20 = arith.constant 1 : i32
    %72 = tpu.dynamic_rotate %65 by %c1_i32_20 dim 1 : vector<2x256xi32>, i32 -> vector<2x256xi32>
    %c0_i32_21 = arith.constant 0 : i32
    %73 = vector.shape_cast %54 : vector<1x256xi1> to vector<1x256xi1>
    %74 = vector.broadcast %73 : vector<1x256xi1> to vector<2x256xi1>
    %75 = vector.broadcast %c0_i32_21 : i32 to vector<2x256xi32>
    %76 = arith.select %74, %72, %75 : vector<2x256xi1>, vector<2x256xi32>
    %77 = arith.ori %71, %76 : vector<2x256xi32>
    %c240_i32_22 = arith.constant 240 : i32
    %78 = tpu.dynamic_rotate %77 by %c240_i32_22 dim 1 : vector<2x256xi32>, i32 -> vector<2x256xi32>
    %c0_i32_23 = arith.constant 0 : i32
    %79 = vector.shape_cast %60 : vector<1x256xi1> to vector<1x256xi1>
    %80 = vector.broadcast %79 : vector<1x256xi1> to vector<2x256xi1>
    %81 = vector.broadcast %c0_i32_23 : i32 to vector<2x256xi32>
    %82 = arith.select %80, %78, %81 : vector<2x256xi1>, vector<2x256xi32>
    %83 = arith.ori %77, %82 : vector<2x256xi32>
    %c16_i32_24 = arith.constant 16 : i32
    %84 = tpu.dynamic_rotate %77 by %c16_i32_24 dim 1 : vector<2x256xi32>, i32 -> vector<2x256xi32>
    %c0_i32_25 = arith.constant 0 : i32
    %85 = vector.shape_cast %58 : vector<1x256xi1> to vector<1x256xi1>
    %86 = vector.broadcast %85 : vector<1x256xi1> to vector<2x256xi1>
    %87 = vector.broadcast %c0_i32_25 : i32 to vector<2x256xi32>
    %88 = arith.select %86, %84, %87 : vector<2x256xi1>, vector<2x256xi32>
    %89 = arith.ori %83, %88 : vector<2x256xi32>
    %c1_i32_26 = arith.constant 1 : i32
    %90 = vector.broadcast %c1_i32_26 : i32 to vector<2x256xi32>
    %91 = arith.andi %89, %90 : vector<2x256xi32>
    %c0_i32_27 = arith.constant 0 : i32
    %92 = vector.broadcast %c0_i32_27 : i32 to vector<2x256xi32>
    %93 = arith.cmpi sgt, %91, %92 : vector<2x256xi32>
    %c2_i32_28 = arith.constant 2 : i32
    %94 = vector.broadcast %c2_i32_28 : i32 to vector<2x256xi32>
    %95 = arith.andi %89, %94 : vector<2x256xi32>
    %c0_i32_29 = arith.constant 0 : i32
    %96 = vector.broadcast %c0_i32_29 : i32 to vector<2x256xi32>
    %97 = arith.cmpi sgt, %95, %96 : vector<2x256xi32>
    %98 = arith.andi %97, %45 : vector<2x256xi1>
    %99 = arith.andi %93, %49 : vector<2x256xi1>
    %100 = arith.ori %98, %99 : vector<2x256xi1>
    %cst_30 = arith.constant 0.000000e+00 : f32
    %101 = vector.broadcast %cst_30 : f32 to vector<2x256xf32>
    %102 = arith.select %100, %43, %101 : vector<2x256xi1>, vector<2x256xf32>
    %cst_31 = arith.constant dense<0.000000e+00> : vector<2xf32>
    %103 = vector.multi_reduction <add>, %102, %cst_31 [1] : vector<2x256xf32> to vector<2xf32>
    %104 = vector.shape_cast %103 : vector<2xf32> to vector<2x1xf32>
    %cst_32 = arith.constant dense<0.000000e+00> : vector<2xf32>
    %105 = vector.multi_reduction <add>, %43, %cst_32 [1] : vector<2x256xf32> to vector<2xf32>
    %106 = vector.shape_cast %105 : vector<2xf32> to vector<2x1xf32>
    %cst_33 = arith.constant dense<0.000000e+00> : vector<2xf32>
    %107 = vector.multi_reduction <add>, %41, %cst_33 [1] : vector<2x256xf32> to vector<2xf32>
    %108 = vector.shape_cast %107 : vector<2xf32> to vector<2x1xf32>
    %cst_34 = arith.constant dense<0.000000e+00> : vector<2xf32>
    %109 = vector.multi_reduction <add>, %34, %cst_34 [1] : vector<2x256xf32> to vector<2xf32>
    %110 = vector.shape_cast %109 : vector<2xf32> to vector<2x1xf32>
    %cst_35 = arith.constant 2.560000e+02 : f32
    %111 = vector.broadcast %cst_35 : f32 to vector<2x1xf32>
    %112 = arith.addf %110, %111 : vector<2x1xf32>
    %cst_36 = arith.constant 2.000000e+00 : f32
    %113 = vector.broadcast %cst_36 : f32 to vector<2x1xf32>
    %114 = arith.mulf %113, %108 : vector<2x1xf32>
    %cst_37 = arith.constant 9.99999997E-7 : f32
    %115 = vector.broadcast %cst_37 : f32 to vector<2x1xf32>
    %116 = arith.addf %112, %115 : vector<2x1xf32>
    %117 = arith.divf %114, %116 : vector<2x1xf32>
    %cst_38 = arith.constant 1.000000e+00 : f32
    %118 = vector.broadcast %cst_38 : f32 to vector<2x1xf32>
    %119 = arith.subf %118, %117 : vector<2x1xf32>
    %120 = tpu.iota {dimensions = array<i32: 0>} : vector<2x1xi32>
    %c1_i32_39 = arith.constant 1 : i32
    %121 = arith.muli %arg0, %c1_i32_39 : i32
    %122 = arith.addi %121, %arg1 : i32
    %c2_i32_40 = arith.constant 2 : i32
    %123 = arith.muli %122, %c2_i32_40 : i32
    %124 = vector.broadcast %123 : i32 to vector<2x1xi32>
    %125 = arith.addi %120, %124 : vector<2x1xi32>
    %c2_i32_41 = arith.constant 2 : i32
    %126 = vector.broadcast %c2_i32_41 : i32 to vector<2x1xi32>
    %127 = arith.cmpi slt, %125, %126 : vector<2x1xi32>
    %128 = arith.extui %127 : vector<2x1xi1> to vector<2x1xi32>
    %129 = arith.sitofp %128 : vector<2x1xi32> to vector<2x1xf32>
    %130 = arith.mulf %104, %129 : vector<2x1xf32>
    %cst_42 = arith.constant dense<0.000000e+00> : vector<1xf32>
    %131 = vector.multi_reduction <add>, %130, %cst_42 [0] : vector<2x1xf32> to vector<1xf32>
    %132 = vector.shape_cast %131 : vector<1xf32> to vector<1x1xf32>
    %133 = arith.mulf %106, %129 : vector<2x1xf32>
    %cst_43 = arith.constant dense<0.000000e+00> : vector<1xf32>
    %134 = vector.multi_reduction <add>, %133, %cst_43 [0] : vector<2x1xf32> to vector<1xf32>
    %135 = vector.shape_cast %134 : vector<1xf32> to vector<1x1xf32>
    %136 = arith.mulf %119, %129 : vector<2x1xf32>
    %cst_44 = arith.constant dense<0.000000e+00> : vector<1xf32>
    %137 = vector.multi_reduction <add>, %136, %cst_44 [0] : vector<2x1xf32> to vector<1xf32>
    %138 = vector.shape_cast %137 : vector<1xf32> to vector<1x1xf32>
    %139 = tpu.iota {dimensions = array<i32: 2>} : vector<1x1x128xi32>
    %c0_i32_45 = arith.constant 0 : i32
    %140 = vector.broadcast %c0_i32_45 : i32 to vector<1x1x128xi32>
    %141 = arith.cmpi eq, %139, %140 : vector<1x1x128xi32>
    %142 = vector.shape_cast %132 : vector<1x1xf32> to vector<1x1x1xf32>
    %cst_46 = arith.constant 0.000000e+00 : f32
    %143 = vector.shape_cast %142 : vector<1x1x1xf32> to vector<1x1x1xf32>
    %144 = vector.broadcast %143 : vector<1x1x1xf32> to vector<1x1x128xf32>
    %145 = vector.broadcast %cst_46 : f32 to vector<1x1x128xf32>
    %146 = arith.select %141, %144, %145 : vector<1x1x128xi1>, vector<1x1x128xf32>
    %c1_i32_47 = arith.constant 1 : i32
    %147 = vector.broadcast %c1_i32_47 : i32 to vector<1x1x128xi32>
    %148 = arith.cmpi eq, %139, %147 : vector<1x1x128xi32>
    %149 = vector.shape_cast %138 : vector<1x1xf32> to vector<1x1x1xf32>
    %cst_48 = arith.constant 0.000000e+00 : f32
    %150 = vector.shape_cast %149 : vector<1x1x1xf32> to vector<1x1x1xf32>
    %151 = vector.broadcast %150 : vector<1x1x1xf32> to vector<1x1x128xf32>
    %152 = vector.broadcast %cst_48 : f32 to vector<1x1x128xf32>
    %153 = arith.select %148, %151, %152 : vector<1x1x128xi1>, vector<1x1x128xf32>
    %154 = arith.addf %146, %153 : vector<1x1x128xf32>
    %c2_i32_49 = arith.constant 2 : i32
    %155 = vector.broadcast %c2_i32_49 : i32 to vector<1x1x128xi32>
    %156 = arith.cmpi eq, %139, %155 : vector<1x1x128xi32>
    %157 = vector.shape_cast %135 : vector<1x1xf32> to vector<1x1x1xf32>
    %cst_50 = arith.constant 0.000000e+00 : f32
    %158 = vector.shape_cast %157 : vector<1x1x1xf32> to vector<1x1x1xf32>
    %159 = vector.broadcast %158 : vector<1x1x1xf32> to vector<1x1x128xf32>
    %160 = vector.broadcast %cst_50 : f32 to vector<1x1x128xf32>
    %161 = arith.select %156, %159, %160 : vector<1x1x128xi1>, vector<1x1x128xf32>
    %162 = arith.addf %154, %161 : vector<1x1x128xf32>
    %c0_51 = arith.constant 0 : index
    %c0_52 = arith.constant 0 : index
    %c0_53 = arith.constant 0 : index
    %163 = vector.load %arg4[%c0_51, %c0_52, %c0_53] : memref<1x1x128xf32, #tpu.memory_space<vmem>>, vector<1x1x128xf32>
    %164 = arith.addf %163, %162 : vector<1x1x128xf32>
    %c0_54 = arith.constant 0 : index
    %c0_55 = arith.constant 0 : index
    %c0_56 = arith.constant 0 : index
    %165 = vector.load %arg4[%c0_54, %c0_55, %c0_56] : memref<1x1x128xf32, #tpu.memory_space<vmem>>, vector<1x1x128xf32>
    tpu.vector_store %arg4[%c0_54, %c0_55, %c0_56], %164 {strides = array<i32>} : memref<1x1x128xf32, #tpu.memory_space<vmem>>, vector<1x1x128xf32>,
    return
  }
  func.func @transform_0(%arg0: i32, %arg1: i32) -> (i32, i32) {
    %c1_i32 = arith.constant 1 : i32
    %0 = arith.muli %arg0, %c1_i32 : i32
    %1 = arith.addi %0, %arg1 : i32
    %c0_i32 = arith.constant 0 : i32
    %c0_i32_0 = arith.constant 0 : i32
    return %1, %c0_i32 : i32, i32
  }
  func.func @transform_1(%arg0: i32, %arg1: i32) -> (i32, i32) {
    %c1_i32 = arith.constant 1 : i32
    %0 = arith.muli %arg0, %c1_i32 : i32
    %1 = arith.addi %0, %arg1 : i32
    %c0_i32 = arith.constant 0 : i32
    %c0_i32_0 = arith.constant 0 : i32
    return %1, %c0_i32 : i32, i32
  }
  func.func @transform_2(%arg0: i32, %arg1: i32) -> (i32, i32, i32) {
    %c0_i32 = arith.constant 0 : i32
    %c0_i32_0 = arith.constant 0 : i32
    %c0_i32_1 = arith.constant 0 : i32
    return %arg0, %c0_i32, %c0_i32_0 : i32, i32, i32
  }
}

</mosaic_0001>

<llo_original>
// kernel: finalloss.1
$region0: #{finalloss.1}
  #allocation0 [shape = 'u32[]', space=smem, size = 0x4, offset = 0x4, fixed_abs, tag = 'smem constant byte address 0x4 - core index']
  #allocation1 [shape = 'u32[144,128]{1,0:T(1,128)}', space=vmem, size = 0x12000, scoped, tag = 'internal scratch']
  %s0 = inlined_call_operand.vmem [shape: f32[2,1024], index: 0, kind: input, shape index: {}]
  %s1 = inlined_call_operand.vmem [shape: s8[2,256], index: 1, kind: input, shape index: {}]
  %s2 = inlined_call_operand.vmem [shape: f32[1,1,128], index: 2, kind: output, shape index: {}]
  %s3 = sld [smem:[#allocation0]]
  $region22: #{finalloss.1} parent=0
    _
  %s5 = ssub.s32 1, %s3
  %s6 = scalar_select 0, %s5, %s3
  // Predicated region
  $region2: #{finalloss.1} parent=0 // pred_check
    _
  $region3: #{finalloss.1} parent=0 // pred_check_branch
    %8 = sbr.rel (0) target = $region5
  $region4: #{finalloss.1} parent=0 // pred_region
    %s9 = sadd.s32 0, 0
    %p10 = scmp.lt.s32.totalorder %s9, 0
    %s11 = scalar_select %p10, %s9, 0
    %s12 = smul.addr %s11, 8
    %s13 = smul.addr %s12, 2
    %s14 = scalar_lea.vmem %s0, %s13
    %s15 = sadd.s32 0, 0
  $region5: #{finalloss.1} parent=0 // pred_fallthru
    _
  // Predicated region
  $region6: #{finalloss.1} parent=0 // pred_check
    _
  $region7: #{finalloss.1} parent=0 // pred_check_branch
    %17 = sbr.rel (0) target = $region9
  $region8: #{finalloss.1} parent=0 // pred_region
    %s18 = sadd.s32 0, 0
    %p19 = scmp.lt.s32.totalorder %s18, 0
    %s20 = scalar_select %p19, %s18, 0
    %s21 = smul.addr %s20, 2
    %s22 = scalar_lea.vmem %s1, %s21
    %s23 = sadd.s32 0, 0
  $region9: #{finalloss.1} parent=0 // pred_fallthru
    _
  %s24 = sadd.s32 0, 0
  %p25 = scmp.lt.s32.totalorder %s24, 0
  %s26 = scalar_select %p25, %s24, 0
  %s27 = smul.addr %s26, 8
  %s28 = smul.addr %s27, 2
  %s29 = scalar_lea.vmem %s0, %s28
  %s30 = sadd.s32 0, 0
  %p31 = scmp.lt.s32.totalorder %s30, 0
  %s32 = scalar_select %p31, %s30, 0
  %s33 = smul.addr %s32, 2
  %s34 = scalar_lea.vmem %s1, %s33
  %s35 = sadd.s32 0, 0
  %p36 = scmp.lt.s32.totalorder %s35, 0
  %s37 = scalar_select %p36, %s35, 0
  %s38 = smul.addr %s37, 8
  %s39 = smul.addr %s38, 2
  %s40 = scalar_lea.vmem %s0, %s39
  %s41 = sadd.s32 0, 0
  %s42 = sadd.s32 0, 0
  %p43 = scmp.lt.s32.totalorder %s42, 0
  %s44 = scalar_select %p43, %s42, 0
  %s45 = smul.addr %s44, 2
  %s46 = scalar_lea.vmem %s1, %s45
  %s47 = sadd.s32 0, 0
  %p48 = scmp.eq.s32.totalorder 0, 0
  // Predicated region
  $region10: #{finalloss.1} parent=0 // pred_check
    %p49 = pneg %p48
  $region11: #{finalloss.1} parent=0 // pred_check_branch
    %51 = sbr.rel (%p49) target = $region13
  $region12: #{finalloss.1} parent=0 // pred_region
    %52 = vst [vmem:[%s2] sm:$0x1] 0.0
  $region13: #{finalloss.1} parent=0 // pred_fallthru
    _
  %v53 = vld [vmem:[%s46] sm:$0x3]
  %v54 = vunpack.c.0.s8 %v53
  %v55 = vld [vmem:[%s40] sm:$0xf]
  %vm56 = vcmp.eq.s32.totalorder %v54, 0
  %v59 = vunpack.c.l.s4 1983009808
  %v60 = vunpack.c.0.s8 %v59
  %v61 = vlaneseq
  %v62 = vshrl.u32 %v61, 7
  %v63 = vsub.s32 %v60, %v62
  %v64 = vrot.slane %v55, %v63
  %v66 = vsel %vm56, %v64, 0.0
  %v67 = vmul.f32 %v55, 1.442695
  %v68 = vpow.pop %v67
  %v69 = vld [vmem:[%s40 + $0x4] sm:$0xf]
  %v70 = vmul.f32 %v69, 1.442695
  %v71 = vpow.pop %v70
  %v72 = vadd.f32 %v68, %v71
  %vm73 = vcmp.gt.f32.partialorder %v69, %v55
  %v74 = vsel %vm73, %v69, %v55
  %v75 = vsel %vm73, 1, 0
  %vm76 = vcmp.eq.s32.totalorder %v54, 1
  %v79 = vunpack.c.l.s4 1983009808
  %v80 = vunpack.c.0.s8 %v79
  %v81 = vlaneseq
  %v82 = vshrl.u32 %v81, 7
  %v83 = vsub.s32 %v80, %v82
  %v84 = vrot.slane %v69, %v83
  %v86 = vsel %vm76, %v84, %v66
  %v87 = vld [vmem:[%s40 + $0x8] sm:$0xf]
  %v88 = vmul.f32 %v87, 1.442695
  %v89 = vpow.pop %v88
  %v90 = vadd.f32 %v72, %v89
  %vm91 = vcmp.gt.f32.partialorder %v87, %v74
  %v92 = vsel %vm91, %v87, %v74
  %v93 = vsel %vm91, 2, %v75
  %vm94 = vcmp.eq.s32.totalorder %v54, 2
  %v97 = vunpack.c.l.s4 1983009808
  %v98 = vunpack.c.0.s8 %v97
  %v99 = vlaneseq
  %v100 = vshrl.u32 %v99, 7
  %v101 = vsub.s32 %v98, %v100
  %v102 = vrot.slane %v87, %v101
  %v104 = vsel %vm94, %v102, %v86
  %v105 = vld [vmem:[%s40 + $0xc] sm:$0xf]
  %v106 = vmul.f32 %v105, 1.442695
  %v107 = vpow.pop %v106
  %v108 = vadd.f32 %v90, %v107
  %vm109 = vcmp.gt.f32.partialorder %v105, %v92
  %v110 = vsel %vm109, 3, %v93
  %vm111 = vcmp.eq.s32.totalorder %v54, 3
  %v114 = vunpack.c.l.s4 1983009808
  %v115 = vunpack.c.0.s8 %v114
  %v116 = vlaneseq
  %v117 = vshrl.u32 %v116, 7
  %v118 = vsub.s32 %v115, %v117
  %v119 = vrot.slane %v105, %v118
  %v121 = vsel %vm111, %v119, %v104
  %v122 = vmul.f32 %v121, 1.442695
  %v123 = vpow.pop %v122
  %v124 = vsub.f32 0.0, %v121
  %vm125 = vcmp.eq.s32.totalorder %v110, 2
  %vm126 = vcmp.eq.s32.totalorder %v110, 1
  %vm127 = vmor %vm126, %vm125
  %vm128 = vmxor %vm127, 1
  %v129 = vlaneseq
  %v130 = vand.u32 %v129, 127
  %v131 = vadd.s32 %v130, 128
  %v132 = vand.u32 %v130, 15
  %v133 = vand.u32 %v131, 15
  %vm134 = vcmp.ne.s32.totalorder %v132, 0
  %vm135 = vcmp.ne.s32.totalorder %v133, 0
  %vm136 = vcmp.ne.s32.totalorder %v132, 15
  %vm137 = vcmp.ne.s32.totalorder %v133, 15
  %vm138 = vcmp.ge.s32.totalorder %v130, 16
  %vm139 = vcmp.ge.s32.totalorder %v131, 16
  %vm140 = vcmp.lt.s32.totalorder %v130, 240
  %vm141 = vcmp.lt.s32.totalorder %v131, 240
  %v142 = vsel %vm125, 1, 0
  %v143 = vsel %vm128, 1, 0
  %v144 = vmul.u32 %v143, 2
  %v145 = vor.u32 %v142, %v144
  %v147 = vunpack.c.l.s4 1983009808
  %v148 = vunpack.c.0.s8 %v147
  %v149 = vlaneseq
  %v150 = vshrl.u32 %v149, 7
  %v151 = vsub.s32 %v148, %v150
  %v152 = vrot.slane %v145, %v151
  %v153 = vcombine.high %v152, %v152
  %154 = vrot.lane.b32.xlu0 %v152, 127
  %v155 = vpop.permute.xlu0 %154
  %156 = vrot.lane.b32.xlu0 %v153, 127
  %v157 = vpop.permute.xlu0 %156
  %vm158 = vcmp.lt.s32.totalorder %v130, 127
  %v159 = vsel %vm158, %v155, %v157
  %v160 = vsel %vm158, %v157, %v155
  %v161 = vsel %vm136, 1, 0
  %v162 = vsel %vm137, 1, 0
  %vm163 = vcmp.eq.s32.totalorder %v161, 1
  %vm164 = vcmp.eq.s32.totalorder %v162, 1
  %v165 = vsel %vm163, %v159, 0
  %v166 = vsel %vm164, %v160, 0
  %v167 = vcombine.low %v165, %v166
  %v169 = vunpack.c.l.s4 1983009808
  %v170 = vunpack.c.0.s8 %v169
  %v171 = vlaneseq
  %v172 = vshrl.u32 %v171, 7
  %v173 = vsub.s32 %v170, %v172
  %v174 = vrot.slane %v167, %v173
  %v175 = vor.u32 %v145, %v174
  %176 = vrot.lane.b32.xlu0 %v152, 1
  %v177 = vpop.permute.xlu0 %176
  %178 = vrot.lane.b32.xlu0 %v153, 1
  %v179 = vpop.permute.xlu0 %178
  %vm180 = vcmp.lt.s32.totalorder %v130, 1
  %v181 = vsel %vm180, %v177, %v179
  %v182 = vsel %vm180, %v179, %v177
  %v183 = vsel %vm134, 1, 0
  %v184 = vsel %vm135, 1, 0
  %vm185 = vcmp.eq.s32.totalorder %v183, 1
  %vm186 = vcmp.eq.s32.totalorder %v184, 1
  %v187 = vsel %vm185, %v182, 0
  %v188 = vsel %vm186, %v181, 0
  %v189 = vcombine.low %v187, %v188
  %v191 = vunpack.c.l.s4 1983009808
  %v192 = vunpack.c.0.s8 %v191
  %v193 = vlaneseq
  %v194 = vshrl.u32 %v193, 7
  %v195 = vsub.s32 %v192, %v194
  %v196 = vrot.slane %v189, %v195
  %v197 = vor.u32 %v175, %v196
  %v199 = vunpack.c.l.s4 1983009808
  %v200 = vunpack.c.0.s8 %v199
  %v201 = vlaneseq
  %v202 = vshrl.u32 %v201, 7
  %v203 = vsub.s32 %v200, %v202
  %v204 = vrot.slane %v197, %v203
  %v205 = vcombine.high %v204, %v204
  %206 = vrot.lane.b32.xlu0 %v204, 112
  %v207 = vpop.permute.xlu0 %206
  %208 = vrot.lane.b32.xlu0 %v205, 112
  %v209 = vpop.permute.xlu0 %208
  %vm210 = vcmp.lt.s32.totalorder %v130, 112
  %v211 = vsel %vm210, %v207, %v209
  %v212 = vsel %vm210, %v209, %v207
  %v213 = vsel %vm140, 1, 0
  %v214 = vsel %vm141, 1, 0
  %vm215 = vcmp.eq.s32.totalorder %v213, 1
  %vm216 = vcmp.eq.s32.totalorder %v214, 1
  %v217 = vsel %vm215, %v211, 0
  %v218 = vsel %vm216, %v212, 0
  %v219 = vcombine.low %v217, %v218
  %v221 = vunpack.c.l.s4 1983009808
  %v222 = vunpack.c.0.s8 %v221
  %v223 = vlaneseq
  %v224 = vshrl.u32 %v223, 7
  %v225 = vsub.s32 %v222, %v224
  %v226 = vrot.slane %v219, %v225
  %v227 = vor.u32 %v197, %v226
  %228 = vrot.lane.b32.xlu0 %v204, 16
  %v229 = vpop.permute.xlu0 %228
  %230 = vrot.lane.b32.xlu0 %v205, 16
  %v231 = vpop.permute.xlu0 %230
  %vm232 = vcmp.lt.s32.totalorder %v130, 16
  %v233 = vsel %vm232, %v229, %v231
  %v234 = vsel %vm232, %v231, %v229
  %v235 = vsel %vm138, 1, 0
  %v236 = vsel %vm139, 1, 0
  %vm237 = vcmp.eq.s32.totalorder %v235, 1
  %vm238 = vcmp.eq.s32.totalorder %v236, 1
  %v239 = vsel %vm237, %v234, 0
  %v240 = vsel %vm238, %v233, 0
  %v241 = vcombine.low %v239, %v240
  %v243 = vunpack.c.l.s4 1983009808
  %v244 = vunpack.c.0.s8 %v243
  %v245 = vlaneseq
  %v246 = vshrl.u32 %v245, 7
  %v247 = vsub.s32 %v244, %v246
  %v248 = vrot.slane %v241, %v247
  %v249 = vor.u32 %v227, %v248
  %v250 = vand.u32 %v249, 1
  %vm251 = vcmp.gt.s32.totalorder %v250, 0
  %v252 = vand.u32 %v249, 2
  %vm253 = vcmp.gt.s32.totalorder %v252, 0
  %vm254 = vmand %vm253, %vm125
  %vm255 = vmand %vm251, %vm128
  %vm256 = vmor %vm254, %vm255
  %v259 = vunpack.c.l.s4 1983009808
  %v260 = vunpack.c.0.s8 %v259
  %v261 = vlaneseq
  %v262 = vshrl.u32 %v261, 7
  %v263 = vsub.s32 %v260, %v262
  %v264 = vrot.slane %v124, %v263
  %v266 = vsel %vm256, %v264, 0.0
  %v269 = vunpack.c.l.s4 1983009808
  %v270 = vunpack.c.0.s8 %v269
  %v271 = vlaneseq
  %v272 = vshrl.u32 %v271, 7
  %v273 = vsub.s32 %v270, %v272
  %v274 = vrot.slane %v266, %v273
  %v275 = vcombine.high %v274, %v274
  %vm278 = vcmask 1041408
  %v279 = vsel %vm278, %v274, 0.0
  %v280 = vsel %vm278, %v275, 0.0
  %v281 = vadd.f32 %v279, %v280
  %282 = vadd.xlane.f32.xlu0 %v281
  %v283 = vpop.xlane.xlu0 %282
  %v284 = vcombine.high %v124, %v124
  %v286 = vsel %vm278, %v124, 0.0
  %v287 = vsel %vm278, %v284, 0.0
  %v288 = vadd.f32 %v286, %v287
  %289 = vadd.xlane.f32.xlu0 %v288
  %v290 = vpop.xlane.xlu0 %289
  %v292 = vcombine.high %v123, %v123
  %v294 = vsel %vm278, %v123, 0.0
  %v295 = vsel %vm278, %v292, 0.0
  %v296 = vadd.f32 %v294, %v295
  %297 = vadd.xlane.f32.xlu0 %v296
  %v298 = vpop.xlane.xlu0 %297
  %v301 = vunpack.c.l.s4 1983009808
  %v302 = vunpack.c.0.s8 %v301
  %v303 = vlaneseq
  %v304 = vshrl.u32 %v303, 7
  %v305 = vsub.s32 %v302, %v304
  %v306 = vrot.slane %v108, %v305
  %v307 = vcombine.high %v306, %v306
  %v310 = vsel %vm278, %v306, 0.0
  %v311 = vsel %vm278, %v307, 0.0
  %v312 = vadd.f32 %v310, %v311
  %313 = vadd.xlane.f32.xlu0 %v312
  %v314 = vpop.xlane.xlu0 %313
  %v315 = vadd.f32 %v314, 256.0
  %v316 = vmul.f32 %v298, 2.0
  %v317 = vadd.f32 %v315, 1e-06
  %v318 = vrcp.pop %v317
  %v319 = vmul.f32 %v316, %v318
  %v320 = vsub.f32 1.0, %v319
  %v321 = vlaneseq
  %v322 = vshrl.u32 %v321, 7
  %s323 = sadd.s32 0, 0
  %s324 = smul.u32 %s323, 2
  %v325 = vstv %s324
  %v326 = vadd.s32 %v322, %v325
  %vm327 = vcmp.lt.s32.totalorder %v326, 2
  %v328 = vsel %vm327, 1, 0
  %v329 = vcvt.s32.f32 %v328
  %v330 = vmul.f32 %v283, %v329
  %v331 = vsel %vm278, %v330, 0.0
  %v332 = vrot.slane %v331, 4
  %v333 = vadd.f32 %v331, %v332
  %v334 = vrot.slane %v333, 2
  %v335 = vadd.f32 %v333, %v334
  %v336 = vrot.slane %v335, 1
  %v337 = vadd.f32 %v335, %v336
  %v338 = vmul.f32 %v290, %v329
  %v339 = vsel %vm278, %v338, 0.0
  %v340 = vrot.slane %v339, 4
  %v341 = vadd.f32 %v339, %v340
  %v342 = vrot.slane %v341, 2
  %v343 = vadd.f32 %v341, %v342
  %v344 = vrot.slane %v343, 1
  %v345 = vadd.f32 %v343, %v344
  %v346 = vmul.f32 %v320, %v329
  %v347 = vsel %vm278, %v346, 0.0
  %v348 = vrot.slane %v347, 4
  %v349 = vadd.f32 %v347, %v348
  %v350 = vrot.slane %v349, 2
  %v351 = vadd.f32 %v349, %v350
  %v352 = vrot.slane %v351, 1
  %v353 = vadd.f32 %v351, %v352
  %vm354 = vcmp.eq.s32.totalorder %v130, 0
  %v355 = vsel %vm354, %v337, 0.0
  %vm356 = vcmp.eq.s32.totalorder %v130, 1
  %v357 = vsel %vm356, %v353, 0.0
  %v358 = vadd.f32 %v355, %v357
  %vm359 = vcmp.eq.s32.totalorder %v130, 2
  %v360 = vsel %vm359, %v345, 0.0
  %v361 = vadd.f32 %v358, %v360
  %v362 = vld [vmem:[%s2] sm:$0x1]
  %v363 = vadd.f32 %v362, %v361
  %364 = vst [vmem:[%s2] sm:$0x1] %v363
  // Predicated region
  $region14: #{finalloss.1} parent=0 // pred_check
    _
  $region15: #{finalloss.1} parent=0 // pred_check_branch
    %366 = sbr.rel (0) target = $region17
  $region16: #{finalloss.1} parent=0 // pred_region
    _
  $region17: #{finalloss.1} parent=0 // pred_fallthru
    _
  // Predicated region
  $region18: #{finalloss.1} parent=0 // pred_check
    _
  $region19: #{finalloss.1} parent=0 // pred_check_branch
    %368 = sbr.rel (0) target = $region21
  $region20: #{finalloss.1} parent=0 // pred_region
    _
  $region21: #{finalloss.1} parent=0 // pred_fallthru
    _

</llo_original>
